<compile_context>
chip_gen: v6e
topology: v6e:2x2x1
jax: 0.10.0
libtpu: 0.0.40
codegen_flags: <defaults>
</compile_context>

<pallas_src>
import functools

import jax
import jax.numpy as jnp
from jax.experimental import pallas as pl
from jax.experimental.pallas import tpu as pltpu


def seg_head_kernel(x_ref, col_ref, w1_ref, b1_ref, w2_ref, b2_ref, o_ref,
                    p_ref, *, W, m_strip, halo):
    # x_ref  : (1, C_in, L)            zero-padded, flattened image, f32
    # col_ref: (1, m_strip)            column index (j) of each strip pixel, i32
    # w1_ref : (C_mid, 9*C_in)         3x3 weights, columns ordered (u, v, ci), bf16
    # b1_ref : (C_mid, 1)              f32
    # w2_ref : (num_classes, C_mid)    1x1 conv weights, bf16
    # b2_ref : (num_classes, 1)        f32
    # o_ref  : (1, num_classes, m_strip) channels-first, lane-dense output block
    # p_ref  : (9*C_in, m_strip)       per-strip im2col scratch, f32 (~18 KB)
    _, c_in, _ = x_ref.shape
    s = pl.program_id(1)

    # 128-aligned dynamic lane slice: strip plus a halo on each side.
    chunk_w = m_strip + 2 * halo
    c0 = pl.multiple_of(s * m_strip, m_strip)
    chunk = x_ref[0, :, pl.ds(c0, chunk_w)]          # (C_in, m_strip + 2*halo)

    # Only column-border masks are needed; row-OOB taps read the zero halo.
    col = col_ref[...]                                # (1, m_strip) i32
    not_left = col != 0                               # for dv == -1 taps
    not_right = col != (W - 1)                        # for dv == +1 taps

    # Build the (9*C_in, m_strip) im2col patch for this strip: row block
    # k = u*3 + v holds the C_in channels of tap (u, v), matching w1's columns.
    for u in range(3):
        for v in range(3):
            k = u * 3 + v
            d = (u - 1) * W + (v - 1)
            tap = chunk[:, halo + d:halo + d + m_strip]      # (C_in, m) static slice
            if v == 0:
                tap = jnp.where(not_left, tap, 0.0)
            elif v == 2:
                tap = jnp.where(not_right, tap, 0.0)
            p_ref[k * c_in:(k + 1) * c_in, :] = tap

    p = p_ref[...].astype(jnp.bfloat16)               # (9*C_in, m)

    # conv1: single MXU pass (K = 9*C_in), f32 accumulation, bias + ReLU in f32.
    y = jnp.dot(w1_ref[...], p, preferred_element_type=jnp.float32)   # (C_mid, m)
    h = jnp.maximum(y + b1_ref[...], 0.0).astype(jnp.bfloat16)

    # conv2 (1x1): lane-dense (num_classes, m) result.
    z = jnp.dot(w2_ref[...], h, preferred_element_type=jnp.float32) + b2_ref[...]
    o_ref[0, :, :] = z.astype(o_ref.dtype)


def segmentation_head(x_nchw, w1_oihw, b1, w2_oi, b2, *, m_strip=128):
    """x_nchw: (N, C_in, H, W); w1_oihw: (C_mid, C_in, 3, 3); w2_oi: (nc, C_mid)."""
    N, C_in, H, W = x_nchw.shape
    C_mid = w1_oihw.shape[0]
    num_classes = w2_oi.shape[0]

    n_pix = H * W
    n_pix_pad = pl.cdiv(n_pix, m_strip) * m_strip     # pixel axis -> 128-multiple
    n_strips = n_pix_pad // m_strip
    halo = pl.cdiv(W + 1, 128) * 128                  # zero halo >= W+1, 128-aligned
    L = halo + n_pix_pad + halo

    # (C_mid, C_in, 3, 3) -> (C_mid, 9*C_in) with column order (u, v, ci), bf16
    # so both matmuls run on the bf16-native MXU path (f32 accumulation).
    w1_mat = jnp.transpose(w1_oihw, (0, 2, 3, 1)).reshape(C_mid, 9 * C_in)
    w1_mat = w1_mat.astype(jnp.bfloat16)
    w2_mat = w2_oi.astype(jnp.bfloat16)
    b1_col = b1.reshape(C_mid, 1).astype(jnp.float32)
    b2_col = b2.reshape(num_classes, 1).astype(jnp.float32)

    # Lane-dense, zero-padded flattened image (padding=1 handled via the halo).
    x_flat = x_nchw.reshape(N, C_in, n_pix).astype(jnp.float32)
    x_padded = jnp.pad(x_flat, ((0, 0), (0, 0), (halo, halo + n_pix_pad - n_pix)))

    # Precomputed column index per padded pixel (for the two border masks).
    col_idx = (jnp.arange(n_pix_pad, dtype=jnp.int32) % W).reshape(1, n_pix_pad)

    kernel = functools.partial(seg_head_kernel, W=W, m_strip=m_strip, halo=halo)

    out = pl.pallas_call(
        kernel,
        out_shape=jax.ShapeDtypeStruct((N, num_classes, n_pix_pad), x_nchw.dtype),
        grid_spec=pltpu.PrefetchScalarGridSpec(
            num_scalar_prefetch=0,
            grid=(N, n_strips),
            in_specs=[
                # Full padded image per batch element; block index constant in s,
                # so it stays resident in VMEM across the strip loop.
                pl.BlockSpec((1, C_in, L), lambda n, s: (n, 0, 0)),
                pl.BlockSpec((1, m_strip), lambda n, s: (0, s)),
                pl.BlockSpec((C_mid, 9 * C_in), lambda n, s: (0, 0)),
                pl.BlockSpec((C_mid, 1), lambda n, s: (0, 0)),
                pl.BlockSpec((num_classes, C_mid), lambda n, s: (0, 0)),
                pl.BlockSpec((num_classes, 1), lambda n, s: (0, 0)),
            ],
            out_specs=pl.BlockSpec((1, num_classes, m_strip),
                                   lambda n, s: (n, 0, s)),
            scratch_shapes=[
                pltpu.VMEM((9 * C_in, m_strip), jnp.float32),
            ],
        ),
        compiler_params=pltpu.CompilerParams(
            dimension_semantics=("parallel", "parallel"),
            vmem_limit_bytes=32 * 1024 * 1024),
    )(x_padded, col_idx, w1_mat, b1_col, w2_mat, b2_col)

    # Output is already channels-first; drop pixel padding, restore spatial dims.
    return out[:, :, :n_pix].reshape(N, num_classes, H, W)


def ref_forward(x_nchw, w1_oihw, b1, w2_oi, b2):
    """Pure-JAX f32 reference matching the PyTorch module semantics."""
    y = jax.lax.conv_general_dilated(
        x_nchw, w1_oihw, window_strides=(1, 1), padding=((1, 1), (1, 1)),
        dimension_numbers=("NCHW", "OIHW", "NCHW"))
    y = jax.nn.relu(y + b1.reshape(1, -1, 1, 1))
    z = jax.lax.conv_general_dilated(
        y, w2_oi.reshape(w2_oi.shape[0], w2_oi.shape[1], 1, 1),
        window_strides=(1, 1), padding="VALID",
        dimension_numbers=("NCHW", "OIHW", "NCHW"))
    return z + b2.reshape(1, -1, 1, 1)


if __name__ == "__main__":
    # SegmentationHead(input_channels=4, num_classes=2) at small shapes.
    N, C_in, H, W = 2, 4, 16, 16
    C_mid, num_classes = 256, 2

    key = jax.random.PRNGKey(0)
    kx, kw1, kb1, kw2, kb2 = jax.random.split(key, 5)

    x = jax.random.normal(kx, (N, C_in, H, W), dtype=jnp.float32)
    w1 = jax.random.normal(kw1, (C_mid, C_in, 3, 3), dtype=jnp.float32) * 0.1
    b1 = jax.random.normal(kb1, (C_mid,), dtype=jnp.float32) * 0.1
    w2 = jax.random.normal(kw2, (num_classes, C_mid), dtype=jnp.float32) * 0.1
    b2 = jax.random.normal(kb2, (num_classes,), dtype=jnp.float32) * 0.1

    out = jax.block_until_ready(segmentation_head(x, w1, b1, w2, b2))
    ref = jax.block_until_ready(ref_forward(x, w1, b1, w2, b2))

    assert out.shape == (N, num_classes, H, W), out.shape
    # bf16 MXU operands with f32 accumulation -> loosened tolerance vs f32 ref.
    assert jnp.allclose(out, ref, atol=5e-2, rtol=5e-2), \
        float(jnp.max(jnp.abs(out - ref)))

    print("KERNEL_OK")
</pallas_src>

<mosaic_0001>
module attributes {stable_mosaic.version = 11 : i64} {
  func.func @seg_head_kernel(%arg0: i32, %arg1: i32, %arg2: memref<1x4x512xf32, #tpu.memory_space<vmem>>, %arg3: memref<1x128xi32, #tpu.memory_space<vmem>>, %arg4: memref<256x36xbf16, #tpu.memory_space<vmem>>, %arg5: memref<256x1xf32, #tpu.memory_space<vmem>>, %arg6: memref<2x256xbf16, #tpu.memory_space<vmem>>, %arg7: memref<2x1xf32, #tpu.memory_space<vmem>>, %arg8: memref<1x2x128xf32, #tpu.memory_space<vmem>>, %arg9: memref<36x128xf32, #tpu.memory_space<vmem>>) attributes {dimension_semantics = [#tpu.dimension_semantics<parallel>, #tpu.dimension_semantics<parallel>], iteration_bounds = array<i64: 2, 2>, scalar_prefetch = 0 : i64, scratch_operands = 1 : i64, tpu.core_type = #tpu.core_type<tc>, window_params = [{transform_indices = @transform_0, window_bounds = array<i64: 1, 4, 512>}, {transform_indices = @transform_1, window_bounds = array<i64: 1, 128>}, {pipeline_mode = #tpu.pipeline_mode<synchronous>, transform_indices = @transform_2, window_bounds = array<i64: 256, 36>}, {pipeline_mode = #tpu.pipeline_mode<synchronous>, transform_indices = @transform_3, window_bounds = array<i64: 256, 1>}, {pipeline_mode = #tpu.pipeline_mode<synchronous>, transform_indices = @transform_4, window_bounds = array<i64: 2, 256>}, {pipeline_mode = #tpu.pipeline_mode<synchronous>, transform_indices = @transform_5, window_bounds = array<i64: 2, 1>}, {transform_indices = @transform_6, window_bounds = array<i64: 1, 2, 128>}]} {
    %c128_i32 = arith.constant 128 : i32
    %0 = arith.muli %arg1, %c128_i32 : i32
    %1 = tpu.assume_multiple %0, 128 : i32
    %c0 = arith.constant 0 : index
    %c0_0 = arith.constant 0 : index
    %2 = arith.index_cast %1 : i32 to index
    %3 = vector.load %arg2[%c0, %c0_0, %2] : memref<1x4x512xf32, #tpu.memory_space<vmem>>, vector<1x4x384xf32>
    %4 = vector.shape_cast %3 : vector<1x4x384xf32> to vector<4x384xf32>
    %c0_1 = arith.constant 0 : index
    %c0_2 = arith.constant 0 : index
    %5 = vector.load %arg3[%c0_1, %c0_2] : memref<1x128xi32, #tpu.memory_space<vmem>>, vector<1x128xi32>
    %c0_i32 = arith.constant 0 : i32
    %6 = vector.broadcast %c0_i32 : i32 to vector<1x128xi32>
    %7 = arith.cmpi ne, %5, %6 : vector<1x128xi32>
    %c15_i32 = arith.constant 15 : i32
    %8 = vector.broadcast %c15_i32 : i32 to vector<1x128xi32>
    %9 = arith.cmpi ne, %5, %8 : vector<1x128xi32>
    %10 = vector.extract_strided_slice %4 {offsets = [0, 111], sizes = [4, 128], strides = [1, 1]} : vector<4x384xf32> to vector<4x128xf32>
    %cst = arith.constant 0.000000e+00 : f32
    %11 = vector.shape_cast %7 : vector<1x128xi1> to vector<1x128xi1>
    %12 = vector.broadcast %11 : vector<1x128xi1> to vector<4x128xi1>
    %13 = vector.broadcast %cst : f32 to vector<4x128xf32>
    %14 = arith.select %12, %10, %13 : vector<4x128xi1>, vector<4x128xf32>
    %c0_3 = arith.constant 0 : index
    %c0_4 = arith.constant 0 : index
    %15 = vector.load %arg9[%c0_3, %c0_4] : memref<36x128xf32, #tpu.memory_space<vmem>>, vector<4x128xf32>
    tpu.vector_store %arg9[%c0_3, %c0_4], %14 {strides = array<i32>} : memref<36x128xf32, #tpu.memory_space<vmem>>, vector<4x128xf32>,
    %16 = vector.extract_strided_slice %4 {offsets = [0, 112], sizes = [4, 128], strides = [1, 1]} : vector<4x384xf32> to vector<4x128xf32>
    %c4 = arith.constant 4 : index
    %c0_5 = arith.constant 0 : index
    %17 = vector.load %arg9[%c4, %c0_5] : memref<36x128xf32, #tpu.memory_space<vmem>>, vector<4x128xf32>
    tpu.vector_store %arg9[%c4, %c0_5], %16 {strides = array<i32>} : memref<36x128xf32, #tpu.memory_space<vmem>>, vector<4x128xf32>,
    %18 = vector.extract_strided_slice %4 {offsets = [0, 113], sizes = [4, 128], strides = [1, 1]} : vector<4x384xf32> to vector<4x128xf32>
    %cst_6 = arith.constant 0.000000e+00 : f32
    %19 = vector.shape_cast %9 : vector<1x128xi1> to vector<1x128xi1>
    %20 = vector.broadcast %19 : vector<1x128xi1> to vector<4x128xi1>
    %21 = vector.broadcast %cst_6 : f32 to vector<4x128xf32>
    %22 = arith.select %20, %18, %21 : vector<4x128xi1>, vector<4x128xf32>
    %c8 = arith.constant 8 : index
    %c0_7 = arith.constant 0 : index
    %23 = vector.load %arg9[%c8, %c0_7] : memref<36x128xf32, #tpu.memory_space<vmem>>, vector<4x128xf32>
    tpu.vector_store %arg9[%c8, %c0_7], %22 {strides = array<i32>} : memref<36x128xf32, #tpu.memory_space<vmem>>, vector<4x128xf32>,
    %24 = vector.extract_strided_slice %4 {offsets = [0, 127], sizes = [4, 128], strides = [1, 1]} : vector<4x384xf32> to vector<4x128xf32>
    %cst_8 = arith.constant 0.000000e+00 : f32
    %25 = vector.shape_cast %7 : vector<1x128xi1> to vector<1x128xi1>
    %26 = vector.broadcast %25 : vector<1x128xi1> to vector<4x128xi1>
    %27 = vector.broadcast %cst_8 : f32 to vector<4x128xf32>
    %28 = arith.select %26, %24, %27 : vector<4x128xi1>, vector<4x128xf32>
    %c12 = arith.constant 12 : index
    %c0_9 = arith.constant 0 : index
    %29 = vector.load %arg9[%c12, %c0_9] : memref<36x128xf32, #tpu.memory_space<vmem>>, vector<4x128xf32>
    tpu.vector_store %arg9[%c12, %c0_9], %28 {strides = array<i32>} : memref<36x128xf32, #tpu.memory_space<vmem>>, vector<4x128xf32>,
    %30 = vector.extract_strided_slice %4 {offsets = [0, 128], sizes = [4, 128], strides = [1, 1]} : vector<4x384xf32> to vector<4x128xf32>
    %c16 = arith.constant 16 : index
    %c0_10 = arith.constant 0 : index
    %31 = vector.load %arg9[%c16, %c0_10] : memref<36x128xf32, #tpu.memory_space<vmem>>, vector<4x128xf32>
    tpu.vector_store %arg9[%c16, %c0_10], %30 {strides = array<i32>} : memref<36x128xf32, #tpu.memory_space<vmem>>, vector<4x128xf32>,
    %32 = vector.extract_strided_slice %4 {offsets = [0, 129], sizes = [4, 128], strides = [1, 1]} : vector<4x384xf32> to vector<4x128xf32>
    %cst_11 = arith.constant 0.000000e+00 : f32
    %33 = vector.shape_cast %9 : vector<1x128xi1> to vector<1x128xi1>
    %34 = vector.broadcast %33 : vector<1x128xi1> to vector<4x128xi1>
    %35 = vector.broadcast %cst_11 : f32 to vector<4x128xf32>
    %36 = arith.select %34, %32, %35 : vector<4x128xi1>, vector<4x128xf32>
    %c20 = arith.constant 20 : index
    %c0_12 = arith.constant 0 : index
    %37 = vector.load %arg9[%c20, %c0_12] : memref<36x128xf32, #tpu.memory_space<vmem>>, vector<4x128xf32>
    tpu.vector_store %arg9[%c20, %c0_12], %36 {strides = array<i32>} : memref<36x128xf32, #tpu.memory_space<vmem>>, vector<4x128xf32>,
    %38 = vector.extract_strided_slice %4 {offsets = [0, 143], sizes = [4, 128], strides = [1, 1]} : vector<4x384xf32> to vector<4x128xf32>
    %cst_13 = arith.constant 0.000000e+00 : f32
    %39 = vector.shape_cast %7 : vector<1x128xi1> to vector<1x128xi1>
    %40 = vector.broadcast %39 : vector<1x128xi1> to vector<4x128xi1>
    %41 = vector.broadcast %cst_13 : f32 to vector<4x128xf32>
    %42 = arith.select %40, %38, %41 : vector<4x128xi1>, vector<4x128xf32>
    %c24 = arith.constant 24 : index
    %c0_14 = arith.constant 0 : index
    %43 = vector.load %arg9[%c24, %c0_14] : memref<36x128xf32, #tpu.memory_space<vmem>>, vector<4x128xf32>
    tpu.vector_store %arg9[%c24, %c0_14], %42 {strides = array<i32>} : memref<36x128xf32, #tpu.memory_space<vmem>>, vector<4x128xf32>,
    %44 = vector.extract_strided_slice %4 {offsets = [0, 144], sizes = [4, 128], strides = [1, 1]} : vector<4x384xf32> to vector<4x128xf32>
    %c28 = arith.constant 28 : index
    %c0_15 = arith.constant 0 : index
    %45 = vector.load %arg9[%c28, %c0_15] : memref<36x128xf32, #tpu.memory_space<vmem>>, vector<4x128xf32>
    tpu.vector_store %arg9[%c28, %c0_15], %44 {strides = array<i32>} : memref<36x128xf32, #tpu.memory_space<vmem>>, vector<4x128xf32>,
    %46 = vector.extract_strided_slice %4 {offsets = [0, 145], sizes = [4, 128], strides = [1, 1]} : vector<4x384xf32> to vector<4x128xf32>
    %cst_16 = arith.constant 0.000000e+00 : f32
    %47 = vector.shape_cast %9 : vector<1x128xi1> to vector<1x128xi1>
    %48 = vector.broadcast %47 : vector<1x128xi1> to vector<4x128xi1>
    %49 = vector.broadcast %cst_16 : f32 to vector<4x128xf32>
    %50 = arith.select %48, %46, %49 : vector<4x128xi1>, vector<4x128xf32>
    %c32 = arith.constant 32 : index
    %c0_17 = arith.constant 0 : index
    %51 = vector.load %arg9[%c32, %c0_17] : memref<36x128xf32, #tpu.memory_space<vmem>>, vector<4x128xf32>
    tpu.vector_store %arg9[%c32, %c0_17], %50 {strides = array<i32>} : memref<36x128xf32, #tpu.memory_space<vmem>>, vector<4x128xf32>,
    %c0_18 = arith.constant 0 : index
    %c0_19 = arith.constant 0 : index
    %52 = vector.load %arg9[%c0_18, %c0_19] : memref<36x128xf32, #tpu.memory_space<vmem>>, vector<36x128xf32>
    %53 = arith.truncf %52 : vector<36x128xf32> to vector<36x128xbf16>
    %c0_20 = arith.constant 0 : index
    %c0_21 = arith.constant 0 : index
    %54 = vector.load %arg4[%c0_20, %c0_21] : memref<256x36xbf16, #tpu.memory_space<vmem>>, vector<256x36xbf16>
    %cst_22 = arith.constant dense<0.000000e+00> : vector<256x128xf32>
    %55 = tpu.matmul %54, %53, %cst_22 {dimension_numbers = #tpu.dot_dimension_numbers<[1], [0], [0], [1], [0, 0, 1, 1], [], []>} : vector<256x36xbf16>, vector<36x128xbf16>, vector<256x128xf32> -> vector<256x128xf32>
    %c0_23 = arith.constant 0 : index
    %c0_24 = arith.constant 0 : index
    %56 = vector.load %arg5[%c0_23, %c0_24] : memref<256x1xf32, #tpu.memory_space<vmem>>, vector<256x1xf32>
    %57 = vector.broadcast %56 : vector<256x1xf32> to vector<256x128xf32>
    %58 = arith.addf %55, %57 : vector<256x128xf32>
    %cst_25 = arith.constant 0.000000e+00 : f32
    %59 = vector.broadcast %cst_25 : f32 to vector<256x128xf32>
    %60 = arith.maximumf %58, %59 : vector<256x128xf32>
    %61 = arith.truncf %60 : vector<256x128xf32> to vector<256x128xbf16>
    %c0_26 = arith.constant 0 : index
    %c0_27 = arith.constant 0 : index
    %62 = vector.load %arg6[%c0_26, %c0_27] : memref<2x256xbf16, #tpu.memory_space<vmem>>, vector<2x256xbf16>
    %cst_28 = arith.constant dense<0.000000e+00> : vector<2x128xf32>
    %63 = tpu.matmul %62, %61, %cst_28 {dimension_numbers = #tpu.dot_dimension_numbers<[1], [0], [0], [1], [0, 0, 1, 1], [], []>} : vector<2x256xbf16>, vector<256x128xbf16>, vector<2x128xf32> -> vector<2x128xf32>
    %c0_29 = arith.constant 0 : index
    %c0_30 = arith.constant 0 : index
    %64 = vector.load %arg7[%c0_29, %c0_30] : memref<2x1xf32, #tpu.memory_space<vmem>>, vector<2x1xf32>
    %65 = vector.broadcast %64 : vector<2x1xf32> to vector<2x128xf32>
    %66 = arith.addf %63, %65 : vector<2x128xf32>
    %c0_31 = arith.constant 0 : index
    %c0_32 = arith.constant 0 : index
    %c0_33 = arith.constant 0 : index
    %67 = vector.load %arg8[%c0_31, %c0_32, %c0_33] : memref<1x2x128xf32, #tpu.memory_space<vmem>>, vector<1x2x128xf32>
    %68 = vector.shape_cast %67 : vector<1x2x128xf32> to vector<2x128xf32>
    %69 = vector.shape_cast %66 : vector<2x128xf32> to vector<1x2x128xf32>
    tpu.vector_store %arg8[%c0_31, %c0_32, %c0_33], %69 {strides = array<i32>} : memref<1x2x128xf32, #tpu.memory_space<vmem>>, vector<1x2x128xf32>,
    return
  }
  func.func @transform_0(%arg0: i32, %arg1: i32) -> (i32, i32, i32) {
    %c0_i32 = arith.constant 0 : i32
    %c0_i32_0 = arith.constant 0 : i32
    %c0_i32_1 = arith.constant 0 : i32
    return %arg0, %c0_i32, %c0_i32_0 : i32, i32, i32
  }
  func.func @transform_1(%arg0: i32, %arg1: i32) -> (i32, i32) {
    %c0_i32 = arith.constant 0 : i32
    %c0_i32_0 = arith.constant 0 : i32
    return %c0_i32, %arg1 : i32, i32
  }
  func.func @transform_2(%arg0: i32, %arg1: i32) -> (i32, i32) {
    %c0_i32 = arith.constant 0 : i32
    %c0_i32_0 = arith.constant 0 : i32
    %c0_i32_1 = arith.constant 0 : i32
    return %c0_i32, %c0_i32_0 : i32, i32
  }
  func.func @transform_3(%arg0: i32, %arg1: i32) -> (i32, i32) {
    %c0_i32 = arith.constant 0 : i32
    %c0_i32_0 = arith.constant 0 : i32
    %c0_i32_1 = arith.constant 0 : i32
    return %c0_i32, %c0_i32_0 : i32, i32
  }
  func.func @transform_4(%arg0: i32, %arg1: i32) -> (i32, i32) {
    %c0_i32 = arith.constant 0 : i32
    %c0_i32_0 = arith.constant 0 : i32
    %c0_i32_1 = arith.constant 0 : i32
    return %c0_i32, %c0_i32_0 : i32, i32
  }
  func.func @transform_5(%arg0: i32, %arg1: i32) -> (i32, i32) {
    %c0_i32 = arith.constant 0 : i32
    %c0_i32_0 = arith.constant 0 : i32
    %c0_i32_1 = arith.constant 0 : i32
    return %c0_i32, %c0_i32_0 : i32, i32
  }
  func.func @transform_6(%arg0: i32, %arg1: i32) -> (i32, i32, i32) {
    %c0_i32 = arith.constant 0 : i32
    %c0_i32_0 = arith.constant 0 : i32
    return %arg0, %c0_i32, %arg1 : i32, i32, i32
  }
}

</mosaic_0001>

<llo_original>
// kernel: tpu_custom_call.1
$region0: #{tpu_custom_call.1}
  #allocation0 [shape = 'u32[]', space=smem, size = 0x4, offset = 0x4, fixed_abs, tag = 'smem constant byte address 0x4 - core index']
  #allocation1 [shape = 'u32[144,128]{1,0:T(1,128)}', space=vmem, size = 0x12000, scoped, tag = 'internal scratch']
  #allocation2 [shape = 'f32[36,128]{1,0:T(8,128)}', space=vmem, size = 0x5000, scoped, tag = 'scratch operand']
  %s0 = inlined_call_operand.vmem [shape: f32[2,4,512], index: 0, kind: input, shape index: {}]
  %s1 = inlined_call_operand.vmem [shape: s32[1,256], index: 1, kind: input, shape index: {}]
  %s2 = inlined_call_operand.vmem [shape: bf16[256,36], index: 2, kind: input, shape index: {}]
  %s3 = inlined_call_operand.vmem [shape: f32[256,1], index: 3, kind: input, shape index: {}]
  %s4 = inlined_call_operand.vmem [shape: bf16[2,256], index: 4, kind: input, shape index: {}]
  %s5 = inlined_call_operand.vmem [shape: f32[2,1], index: 5, kind: input, shape index: {}]
  %s6 = inlined_call_operand.hbm [shape: f32[2,2,256], index: 6, kind: output, shape index: {}]
  %s7 = sld [smem:[#allocation0]]
  $region57: #{tpu_custom_call.1} parent=0
    _
  %s9 = ssub.s32 1, %s7
  %s10 = scalar_select 0, %s9, %s7
  $region1: #{tpu_custom_call.1} parent=0
    #allocation3 [shape = 'u8[2048]{0}', space=vmem, size = 0x800, scoped, tag = 'output window, operand 0']
    #allocation4 [shape = 's32[2]{0}', space=sflag, size = 0x8, scoped, tag = 'scoped memory for tpu_custom_call.1']
    %11 = vsyncpa [#allocation4], 0
    %s12 = scalar_lea.sflag [#allocation4], 1
    %13 = vsyncpa %s12, 0
    loop: start=0, step=1, limit=6
    $region2: #{tpu_custom_call.1} parent=1 // loop_pre_header
      _
    $region3: #{tpu_custom_call.1} parent=1 // loop_header
      %s15 = sphi 0, %s19
      %p16 = scmp.ge.s32.totalorder %s15, 6
      %s22 = sphi 0, %s34
      %s23 = sphi 0, %s30
      %s24 = sphi 0, %s22
      %s25 = sphi 0, %s23
      %s26 = sphi 0, %s24
      %s27 = sphi 0, %s25
      %s37 = sphi 0, %s39
      %s40 = sphi 0, %s37
      %s41 = sphi 0, %s40
      %s57 = sphi 0, %s41
      %s63 = sphi 0, %s65
      %s66 = sphi 0, %s63
      %s67 = sphi 0, %s66
      %s83 = sphi 0, %s67
      %s87 = sphi 0, %s87
      %s89 = sphi 0, %s87
      %s90 = sphi 0, %s89
      %s104 = sphi 0, %s90
      %s108 = sphi 0, %s108
      %s110 = sphi 0, %s108
      %s111 = sphi 0, %s110
      %s125 = sphi 0, %s111
      %s129 = sphi 0, %s129
      %s131 = sphi 0, %s129
      %s132 = sphi 0, %s131
      %s146 = sphi 0, %s132
      %s150 = sphi 0, %s150
      %s152 = sphi 0, %s150
      %s153 = sphi 0, %s152
      %s167 = sphi 0, %s153
      %s175 = sphi 0, %s177
      %s178 = sphi 0, %s175
      %s179 = sphi 0, %s178
      %s195 = sphi 0, %s179
    $region4: #{tpu_custom_call.1} parent=1 // loop_header_branch
      %18 = sbr.rel (%p16) target = $region8
    $region5: #{tpu_custom_call.1} parent=1 // loop_body
      %s20 = ssub.s32 %s15, 1
      %s21 = ssub.s32 %s15, 2
      %s28 = sadd.s32 1, %s23
      %p29 = scmp.ge.s32.totalorder %s28, 2
      %s30 = scalar_select %p29, 0, %s28
      %s31 = sadd.s32 1, %s22
      %s32 = scalar_select %p29, %s31, %s22
      %p33 = scmp.ge.s32.totalorder %s32, 2
      %s34 = scalar_select %p33, 0, %s32
      %s35 = ssub.s32 %s22, %s34
      %p36 = scmp.eq.s32.totalorder %s35, 0
      %s38 = sadd.s32 %s37, 1
      %s39 = scalar_select %p36, %s37, %s38
      %p42 = pneg %p36
      %p43 = scmp.eq.s32.totalorder %s15, 3
      %p44 = por %p42, %p43
      %p45 = scmp.ne.s32.totalorder %s37, %s40
      %p46 = scmp.eq.s32.totalorder %s15, 0
      %p47 = por %p45, %p46
      %p48 = scmp.ne.s32.totalorder %s37, %s40
      %p49 = scmp.eq.s32.totalorder %s20, 3
      %p50 = por %p48, %p49
      %p51 = scmp.ne.s32.totalorder %s40, %s41
      %p52 = scmp.eq.s32.totalorder %s20, 0
      %p53 = por %p51, %p52
      %p54 = scmp.ne.s32.totalorder %s40, %s41
      %p55 = scmp.eq.s32.totalorder %s21, 3
      %p56 = por %p54, %p55
      %p58 = scmp.ne.s32.totalorder %s41, %s57
      %p59 = scmp.eq.s32.totalorder %s21, 0
      %p60 = por %p58, %p59
      %s61 = ssub.s32 %s23, %s30
      %p62 = scmp.eq.s32.totalorder %s61, 0
      %s64 = sadd.s32 %s63, 1
      %s65 = scalar_select %p62, %s63, %s64
      %p68 = pneg %p62
      %p69 = scmp.eq.s32.totalorder %s15, 3
      %p70 = por %p68, %p69
      %p71 = scmp.ne.s32.totalorder %s63, %s66
      %p72 = scmp.eq.s32.totalorder %s15, 0
      %p73 = por %p71, %p72
      %p74 = scmp.ne.s32.totalorder %s63, %s66
      %p75 = scmp.eq.s32.totalorder %s20, 3
      %p76 = por %p74, %p75
      %p77 = scmp.ne.s32.totalorder %s66, %s67
      %p78 = scmp.eq.s32.totalorder %s20, 0
      %p79 = por %p77, %p78
      %p80 = scmp.ne.s32.totalorder %s66, %s67
      %p81 = scmp.eq.s32.totalorder %s21, 3
      %p82 = por %p80, %p81
      %p84 = scmp.ne.s32.totalorder %s67, %s83
      %p85 = scmp.eq.s32.totalorder %s21, 0
      %p86 = por %p84, %p85
      %s88 = sadd.s32 %s87, 1
      %p91 = scmp.eq.s32.totalorder %s15, 3
      %p92 = scmp.ne.s32.totalorder %s87, %s89
      %p93 = scmp.eq.s32.totalorder %s15, 0
      %p94 = por %p92, %p93
      %p95 = scmp.ne.s32.totalorder %s87, %s89
      %p96 = scmp.eq.s32.totalorder %s20, 3
      %p97 = por %p95, %p96
      %p98 = scmp.ne.s32.totalorder %s89, %s90
      %p99 = scmp.eq.s32.totalorder %s20, 0
      %p100 = por %p98, %p99
      %p101 = scmp.ne.s32.totalorder %s89, %s90
      %p102 = scmp.eq.s32.totalorder %s21, 3
      %p103 = por %p101, %p102
      %p105 = scmp.ne.s32.totalorder %s90, %s104
      %p106 = scmp.eq.s32.totalorder %s21, 0
      %p107 = por %p105, %p106
      %s109 = sadd.s32 %s108, 1
      %p112 = scmp.eq.s32.totalorder %s15, 3
      %p113 = scmp.ne.s32.totalorder %s108, %s110
      %p114 = scmp.eq.s32.totalorder %s15, 0
      %p115 = por %p113, %p114
      %p116 = scmp.ne.s32.totalorder %s108, %s110
      %p117 = scmp.eq.s32.totalorder %s20, 3
      %p118 = por %p116, %p117
      %p119 = scmp.ne.s32.totalorder %s110, %s111
      %p120 = scmp.eq.s32.totalorder %s20, 0
      %p121 = por %p119, %p120
      %p122 = scmp.ne.s32.totalorder %s110, %s111
      %p123 = scmp.eq.s32.totalorder %s21, 3
      %p124 = por %p122, %p123
      %p126 = scmp.ne.s32.totalorder %s111, %s125
      %p127 = scmp.eq.s32.totalorder %s21, 0
      %p128 = por %p126, %p127
      %s130 = sadd.s32 %s129, 1
      %p133 = scmp.eq.s32.totalorder %s15, 3
      %p134 = scmp.ne.s32.totalorder %s129, %s131
      %p135 = scmp.eq.s32.totalorder %s15, 0
      %p136 = por %p134, %p135
      %p137 = scmp.ne.s32.totalorder %s129, %s131
      %p138 = scmp.eq.s32.totalorder %s20, 3
      %p139 = por %p137, %p138
      %p140 = scmp.ne.s32.totalorder %s131, %s132
      %p141 = scmp.eq.s32.totalorder %s20, 0
      %p142 = por %p140, %p141
      %p143 = scmp.ne.s32.totalorder %s131, %s132
      %p144 = scmp.eq.s32.totalorder %s21, 3
      %p145 = por %p143, %p144
      %p147 = scmp.ne.s32.totalorder %s132, %s146
      %p148 = scmp.eq.s32.totalorder %s21, 0
      %p149 = por %p147, %p148
      %s151 = sadd.s32 %s150, 1
      %p154 = scmp.eq.s32.totalorder %s15, 3
      %p155 = scmp.ne.s32.totalorder %s150, %s152
      %p156 = scmp.eq.s32.totalorder %s15, 0
      %p157 = por %p155, %p156
      %p158 = scmp.ne.s32.totalorder %s150, %s152
      %p159 = scmp.eq.s32.totalorder %s20, 3
      %p160 = por %p158, %p159
      %p161 = scmp.ne.s32.totalorder %s152, %s153
      %p162 = scmp.eq.s32.totalorder %s20, 0
      %p163 = por %p161, %p162
      %p164 = scmp.ne.s32.totalorder %s152, %s153
      %p165 = scmp.eq.s32.totalorder %s21, 3
      %p166 = por %p164, %p165
      %p168 = scmp.ne.s32.totalorder %s153, %s167
      %p169 = scmp.eq.s32.totalorder %s21, 0
      %p170 = por %p168, %p169
      %s171 = ssub.s32 %s22, %s34
      %s172 = ssub.s32 %s23, %s30
      %s173 = sor.u32 %s171, %s172
      %p174 = scmp.eq.s32.totalorder %s173, 0
      %s176 = sadd.s32 %s175, 1
      %s177 = scalar_select %p174, %s175, %s176
      %p180 = pneg %p174
      %p181 = scmp.eq.s32.totalorder %s15, 3
      %p182 = por %p180, %p181
      %p183 = scmp.ne.s32.totalorder %s175, %s178
      %p184 = scmp.eq.s32.totalorder %s15, 0
      %p185 = por %p183, %p184
      %p186 = scmp.ne.s32.totalorder %s175, %s178
      %p187 = scmp.eq.s32.totalorder %s20, 3
      %p188 = por %p186, %p187
      %p189 = scmp.ne.s32.totalorder %s178, %s179
      %p190 = scmp.eq.s32.totalorder %s20, 0
      %p191 = por %p189, %p190
      %p192 = scmp.ne.s32.totalorder %s178, %s179
      %p193 = scmp.eq.s32.totalorder %s21, 3
      %p194 = por %p192, %p193
      %p196 = scmp.ne.s32.totalorder %s179, %s195
      %p197 = scmp.eq.s32.totalorder %s21, 0
      %p198 = por %p196, %p197
      %p199 = scmp.le.s32.totalorder 1, %s15
      %p200 = scmp.lt.s32.totalorder %s15, 5
      %p201 = pnand %p199, %p200
      %p202 = pneg %p201
      // Predicated region
      $region9: #{tpu_custom_call.1} parent=5 // pred_check
        _
      $region10: #{tpu_custom_call.1} parent=5 // pred_check_branch
        %204 = sbr.rel (%p201) target = $region12
      $region11: #{tpu_custom_call.1} parent=5 // pred_region
        %s205 = ssub.s32 %s15, 1
        // Predicated region
        $region13: #{tpu_custom_call.1} parent=11 // pred_check
          %p206 = pneg %p100
        $region14: #{tpu_custom_call.1} parent=11 // pred_check_branch
          %208 = sbr.rel (%p206) target = $region16
        $region15: #{tpu_custom_call.1} parent=11 // pred_region
          _
        $region16: #{tpu_custom_call.1} parent=11 // pred_fallthru
          _
        // Predicated region
        $region17: #{tpu_custom_call.1} parent=11 // pred_check
          %p209 = pneg %p121
        $region18: #{tpu_custom_call.1} parent=11 // pred_check_branch
          %211 = sbr.rel (%p209) target = $region20
        $region19: #{tpu_custom_call.1} parent=11 // pred_region
          _
        $region20: #{tpu_custom_call.1} parent=11 // pred_fallthru
          _
        // Predicated region
        $region21: #{tpu_custom_call.1} parent=11 // pred_check
          %p212 = pneg %p142
        $region22: #{tpu_custom_call.1} parent=11 // pred_check_branch
          %214 = sbr.rel (%p212) target = $region24
        $region23: #{tpu_custom_call.1} parent=11 // pred_region
          _
        $region24: #{tpu_custom_call.1} parent=11 // pred_fallthru
          _
        // Predicated region
        $region25: #{tpu_custom_call.1} parent=11 // pred_check
          %p215 = pneg %p163
        $region26: #{tpu_custom_call.1} parent=11 // pred_check_branch
          %217 = sbr.rel (%p215) target = $region28
        $region27: #{tpu_custom_call.1} parent=11 // pred_region
          _
        $region28: #{tpu_custom_call.1} parent=11 // pred_fallthru
          _
      $region12: #{tpu_custom_call.1} parent=5 // pred_fallthru
        _
      %p218 = scmp.lt.s32.totalorder %s15, 4
      // Predicated region
      $region29: #{tpu_custom_call.1} parent=5 // pred_check
        %p219 = pneg %p218
      $region30: #{tpu_custom_call.1} parent=5 // pred_check_branch
        %221 = sbr.rel (%p219) target = $region32
      $region31: #{tpu_custom_call.1} parent=5 // pred_region
        // Predicated region
        $region33: #{tpu_custom_call.1} parent=31 // pred_check
          %p222 = pneg %p47
        $region34: #{tpu_custom_call.1} parent=31 // pred_check_branch
          %224 = sbr.rel (%p222) target = $region36
        $region35: #{tpu_custom_call.1} parent=31 // pred_region
          %p225 = scmp.lt.s32.totalorder %s22, 1
          %s226 = scalar_select %p225, %s22, 1
          %s227 = smul.addr %s226, 4
          %s228 = smul.addr %s227, 4
          %s229 = scalar_lea.vmem %s0, %s228
        $region36: #{tpu_custom_call.1} parent=31 // pred_fallthru
          _
        // Predicated region
        $region37: #{tpu_custom_call.1} parent=31 // pred_check
          %p230 = pneg %p73
        $region38: #{tpu_custom_call.1} parent=31 // pred_check_branch
          %232 = sbr.rel (%p230) target = $region40
        $region39: #{tpu_custom_call.1} parent=31 // pred_region
          %p233 = scmp.lt.s32.totalorder %s23, 1
          %s234 = scalar_select %p233, %s23, 1
          %s235 = scalar_lea.vmem %s1, %s234
        $region40: #{tpu_custom_call.1} parent=31 // pred_fallthru
          _
      $region32: #{tpu_custom_call.1} parent=5 // pred_fallthru
        _
      %p236 = scmp.le.s32.totalorder 1, %s15
      %p237 = scmp.lt.s32.totalorder %s15, 5
      %p238 = pnand %p236, %p237
      %p239 = pneg %p238
      // Predicated region
      $region41: #{tpu_custom_call.1} parent=5 // pred_check
        _
      $region42: #{tpu_custom_call.1} parent=5 // pred_check_branch
        %241 = sbr.rel (%p238) target = $region44
      $region43: #{tpu_custom_call.1} parent=5 // pred_region
        %s242 = ssub.s32 %s15, 1
        %p243 = scmp.lt.s32.totalorder %s24, 1
        %s244 = scalar_select %p243, %s24, 1
        %s245 = smul.addr %s244, 4
        %s246 = smul.addr %s245, 4
        %s247 = scalar_lea.vmem %s0, %s246
        %p248 = pneg %p53
        %p249 = pneg %p50
        %p250 = scmp.lt.s32.totalorder %s25, 1
        %s251 = scalar_select %p250, %s25, 1
        %s252 = scalar_lea.vmem %s1, %s251
        %p253 = pneg %p79
        %p254 = pneg %p76
        %p255 = pneg %p100
        %p256 = pneg %p97
        %p257 = pneg %p121
        %p258 = pneg %p118
        %p259 = pneg %p142
        %p260 = pneg %p139
        %p261 = pneg %p163
        %p262 = pneg %p160
        %p263 = pneg %p191
        %p264 = pneg %p188
        %s265 = sand.u32 %s178, 1
        %s266 = scalar_lea.sflag [#allocation4], %s265
        %s267 = sand.u32 %s178, 1
        %s268 = smul.addr %s267, 2
        %s269 = scalar_lea.vmem [#allocation3], %s268
        %p270 = scmp.lt.s32.totalorder %s24, 1
        %s271 = scalar_select %p270, %s24, 1
        %s272 = smul.addr %s271, 4
        %s273 = smul.addr %s272, 4
        %s274 = scalar_lea.vmem %s0, %s273
        %p275 = scmp.lt.s32.totalorder %s25, 1
        %s276 = scalar_select %p275, %s25, 1
        %s277 = scalar_lea.vmem %s1, %s276
        %s279 = smul.u32 %s25, 128
        %s280 = sshra.s32 %s279, 7
        %s281 = sand.u32 %s279, 127
        %s282 = smul.addr %s280, 4
        %s283 = scalar_lea.vmem %s274, %s282
        %v284 = vld [vmem:[%s283] sm:$0xff]
        %v285 = vld [vmem:[%s283 + $0x8] sm:$0xf]
        %v286 = vld [vmem:[%s277] sm:$0x1]
        %vm287 = vcmp.ne.s32.totalorder %v286, 0
        %vm288 = vcmp.ne.s32.totalorder %v286, 15
        %v289 = vsel %vm287, 1, 0
        %v290 = vlaneseq
        %v291 = vshrl.u32 %v290, 7
        %v292 = vsub.s32 0, %v291
        %v293 = vrot.slane %v289, %v292
        %vm294 = vcmp.eq.s32.totalorder %v293, 1
        %v296 = vcombine.high %v284, %v284
        %297 = vrot.lane.b32.xlu0 %v284, 17
        %v298 = vpop.permute.xlu0 %297
        %299 = vrot.lane.b32.xlu0 %v296, 17
        %v300 = vpop.permute.xlu0 %299
        %vm301 = vcmask 138240
        %v302 = vsel %vm301, %v298, %v300
        %v304 = vsel %vm294, %v302, 0.0
        %305 = vst [vmem:[#allocation2] sm:$0xf] %v304
        %306 = vrot.lane.b32.xlu0 %v284, 16
        %v307 = vpop.permute.xlu0 %306
        %308 = vrot.lane.b32.xlu0 %v296, 16
        %v309 = vpop.permute.xlu0 %308
        %vm310 = vcmask 130048
        %v311 = vsel %vm310, %v307, %v309
        %313 = vst [vmem:[#allocation2 + $0x4] sm:$0xf] %v311
        %v314 = vsel %vm288, 1, 0
        %v315 = vlaneseq
        %v316 = vshrl.u32 %v315, 7
        %v317 = vsub.s32 0, %v316
        %v318 = vrot.slane %v314, %v317
        %vm319 = vcmp.eq.s32.totalorder %v318, 1
        %320 = vrot.lane.b32.xlu0 %v284, 15
        %v321 = vpop.permute.xlu0 %320
        %322 = vrot.lane.b32.xlu0 %v296, 15
        %v323 = vpop.permute.xlu0 %322
        %vm324 = vcmask 121856
        %v325 = vsel %vm324, %v321, %v323
        %v327 = vsel %vm319, %v325, 0.0
        %328 = vst [vmem:[#allocation2 + $0x8] sm:$0xf] %v327
        %329 = vrot.lane.b32.xlu0 %v284, 1
        %v330 = vpop.permute.xlu0 %329
        %331 = vrot.lane.b32.xlu0 %v296, 1
        %v332 = vpop.permute.xlu0 %331
        %vm333 = vcmask 7168
        %v334 = vsel %vm333, %v330, %v332
        %v336 = vsel %vm294, %v334, 0.0
        %337 = vst [vmem:[#allocation2 + $0xc] sm:$0xf] %v336
        %339 = vst [vmem:[#allocation2 + $0x10] sm:$0xf] %v296
        %341 = vrot.lane.b32.xlu0 %v296, 127
        %v342 = vpop.permute.xlu0 %341
        %343 = vrot.lane.b32.xlu0 %v285, 127
        %v344 = vpop.permute.xlu0 %343
        %vm345 = vcmask 1039360
        %v346 = vsel %vm345, %v342, %v344
        %v348 = vsel %vm319, %v346, 0.0
        %349 = vst [vmem:[#allocation2 + $0x14] sm:$0xf] %v348
        %350 = vrot.lane.b32.xlu0 %v296, 113
        %v351 = vpop.permute.xlu0 %350
        %352 = vrot.lane.b32.xlu0 %v285, 113
        %v353 = vpop.permute.xlu0 %352
        %vm354 = vcmask 924672
        %v355 = vsel %vm354, %v351, %v353
        %v357 = vsel %vm294, %v355, 0.0
        %358 = vst [vmem:[#allocation2 + $0x18] sm:$0xf] %v357
        %359 = vrot.lane.b32.xlu0 %v296, 112
        %v360 = vpop.permute.xlu0 %359
        %361 = vrot.lane.b32.xlu0 %v285, 112
        %v362 = vpop.permute.xlu0 %361
        %vm363 = vcmask 916480
        %v364 = vsel %vm363, %v360, %v362
        %366 = vst [vmem:[#allocation2 + $0x1c] sm:$0xf] %v364
        %367 = vrot.lane.b32.xlu0 %v296, 111
        %v368 = vpop.permute.xlu0 %367
        %369 = vrot.lane.b32.xlu0 %v285, 111
        %v370 = vpop.permute.xlu0 %369
        %vm371 = vcmask 908288
        %v372 = vsel %vm371, %v368, %v370
        %v374 = vsel %vm319, %v372, 0.0
        %375 = vst [vmem:[#allocation2 + $0x20] sm:$0xf] %v374
        %v376 = vld [vmem:[#allocation2] sm:$0xff]
        %v377 = vld [vmem:[#allocation2 + $0x8] sm:$0xff]
        %v378 = vld [vmem:[#allocation2 + $0x10] sm:$0xff]
        %v379 = vld [vmem:[#allocation2 + $0x18] sm:$0xff]
        %v380 = vld [vmem:[#allocation2 + $0x20] sm:$0xf]
        %v381 = vpack.c.bf16 %v377, %v376
        %v382 = vpack.c.bf16 %v379, %v378
        %v383 = vpack.c.bf16 %v380, %v380
        %v384 = vld [vmem:[%s2] sm:$0xf]
        %v385 = vld [vmem:[%s2 + $0x4] sm:$0xf]
        %v386 = vld [vmem:[%s2 + $0x8] sm:$0xf]
        %v387 = vld [vmem:[%s2 + $0xc] sm:$0xf]
        %v388 = vld [vmem:[%s2 + $0x10] sm:$0xf]
        %v389 = vld [vmem:[%s2 + $0x14] sm:$0xf]
        %v390 = vld [vmem:[%s2 + $0x18] sm:$0xf]
        %v391 = vld [vmem:[%s2 + $0x1c] sm:$0xf]
        %v392 = vld [vmem:[%s2 + $0x20] sm:$0xf]
        %v393 = vld [vmem:[%s2 + $0x24] sm:$0xf]
        %v394 = vld [vmem:[%s2 + $0x28] sm:$0xf]
        %v395 = vld [vmem:[%s2 + $0x2c] sm:$0xf]
        %v396 = vld [vmem:[%s2 + $0x30] sm:$0xf]
        %v397 = vld [vmem:[%s2 + $0x34] sm:$0xf]
        %v398 = vld [vmem:[%s2 + $0x38] sm:$0xf]
        %v399 = vld [vmem:[%s2 + $0x3c] sm:$0xf]
        %v400 = vld [vmem:[%s2 + $0x40] sm:$0xf]
        %v401 = vld [vmem:[%s2 + $0x44] sm:$0xf]
        %v402 = vld [vmem:[%s2 + $0x48] sm:$0xf]
        %v403 = vld [vmem:[%s2 + $0x4c] sm:$0xf]
        %v404 = vld [vmem:[%s2 + $0x50] sm:$0xf]
        %v405 = vld [vmem:[%s2 + $0x54] sm:$0xf]
        %v406 = vld [vmem:[%s2 + $0x58] sm:$0xf]
        %v407 = vld [vmem:[%s2 + $0x5c] sm:$0xf]
        %v408 = vld [vmem:[%s2 + $0x60] sm:$0xf]
        %v409 = vld [vmem:[%s2 + $0x64] sm:$0xf]
        %v410 = vld [vmem:[%s2 + $0x68] sm:$0xf]
        %v411 = vld [vmem:[%s2 + $0x6c] sm:$0xf]
        %v412 = vld [vmem:[%s2 + $0x70] sm:$0xf]
        %v413 = vld [vmem:[%s2 + $0x74] sm:$0xf]
        %v414 = vld [vmem:[%s2 + $0x78] sm:$0xf]
        %v415 = vld [vmem:[%s2 + $0x7c] sm:$0xf]
        %v416 = vld [vmem:[%s3] sm:$0xff]
        %v417 = vld [vmem:[%s3 + $0x8] sm:$0xff]
        %v418 = vld [vmem:[%s3 + $0x10] sm:$0xff]
        %v419 = vld [vmem:[%s3 + $0x18] sm:$0xff]
        %v420 = vld [vmem:[%s3 + $0x20] sm:$0xff]
        %v421 = vld [vmem:[%s3 + $0x28] sm:$0xff]
        %v422 = vld [vmem:[%s3 + $0x30] sm:$0xff]
        %v423 = vld [vmem:[%s3 + $0x38] sm:$0xff]
        %v424 = vld [vmem:[%s3 + $0x40] sm:$0xff]
        %v425 = vld [vmem:[%s3 + $0x48] sm:$0xff]
        %v426 = vld [vmem:[%s3 + $0x50] sm:$0xff]
        %v427 = vld [vmem:[%s3 + $0x58] sm:$0xff]
        %v428 = vld [vmem:[%s3 + $0x60] sm:$0xff]
        %v429 = vld [vmem:[%s3 + $0x68] sm:$0xff]
        %v430 = vld [vmem:[%s3 + $0x70] sm:$0xff]
        %v431 = vld [vmem:[%s3 + $0x78] sm:$0xff]
        %v432 = vld [vmem:[%s3 + $0x80] sm:$0xff]
        %v433 = vld [vmem:[%s3 + $0x88] sm:$0xff]
        %v434 = vld [vmem:[%s3 + $0x90] sm:$0xff]
        %v435 = vld [vmem:[%s3 + $0x98] sm:$0xff]
        %v436 = vld [vmem:[%s3 + $0xa0] sm:$0xff]
        %v437 = vld [vmem:[%s3 + $0xa8] sm:$0xff]
        %v438 = vld [vmem:[%s3 + $0xb0] sm:$0xff]
        %v439 = vld [vmem:[%s3 + $0xb8] sm:$0xff]
        %v440 = vld [vmem:[%s3 + $0xc0] sm:$0xff]
        %v441 = vld [vmem:[%s3 + $0xc8] sm:$0xff]
        %v442 = vld [vmem:[%s3 + $0xd0] sm:$0xff]
        %v443 = vld [vmem:[%s3 + $0xd8] sm:$0xff]
        %v444 = vld [vmem:[%s3 + $0xe0] sm:$0xff]
        %v445 = vld [vmem:[%s3 + $0xe8] sm:$0xff]
        %v446 = vld [vmem:[%s3 + $0xf0] sm:$0xff]
        %v447 = vld [vmem:[%s3 + $0xf8] sm:$0xff]
        %449 = vset.pattern.permute.xlu0 0
        %450 = vperm.xlu0 %449, %v416
        %v451 = vpop.permute.xlu0 %450
        %454 = vset.pattern.permute.xlu0 0
        %455 = vperm.xlu0 %454, %v417
        %v456 = vpop.permute.xlu0 %455
        %459 = vset.pattern.permute.xlu0 0
        %460 = vperm.xlu0 %459, %v418
        %v461 = vpop.permute.xlu0 %460
        %464 = vset.pattern.permute.xlu0 0
        %465 = vperm.xlu0 %464, %v419
        %v466 = vpop.permute.xlu0 %465
        %469 = vset.pattern.permute.xlu0 0
        %470 = vperm.xlu0 %469, %v420
        %v471 = vpop.permute.xlu0 %470
        %474 = vset.pattern.permute.xlu0 0
        %475 = vperm.xlu0 %474, %v421
        %v476 = vpop.permute.xlu0 %475
        %479 = vset.pattern.permute.xlu0 0
        %480 = vperm.xlu0 %479, %v422
        %v481 = vpop.permute.xlu0 %480
        %484 = vset.pattern.permute.xlu0 0
        %485 = vperm.xlu0 %484, %v423
        %v486 = vpop.permute.xlu0 %485
        %489 = vset.pattern.permute.xlu0 0
        %490 = vperm.xlu0 %489, %v424
        %v491 = vpop.permute.xlu0 %490
        %494 = vset.pattern.permute.xlu0 0
        %495 = vperm.xlu0 %494, %v425
        %v496 = vpop.permute.xlu0 %495
        %499 = vset.pattern.permute.xlu0 0
        %500 = vperm.xlu0 %499, %v426
        %v501 = vpop.permute.xlu0 %500
        %504 = vset.pattern.permute.xlu0 0
        %505 = vperm.xlu0 %504, %v427
        %v506 = vpop.permute.xlu0 %505
        %509 = vset.pattern.permute.xlu0 0
        %510 = vperm.xlu0 %509, %v428
        %v511 = vpop.permute.xlu0 %510
        %514 = vset.pattern.permute.xlu0 0
        %515 = vperm.xlu0 %514, %v429
        %v516 = vpop.permute.xlu0 %515
        %519 = vset.pattern.permute.xlu0 0
        %520 = vperm.xlu0 %519, %v430
        %v521 = vpop.permute.xlu0 %520
        %524 = vset.pattern.permute.xlu0 0
        %525 = vperm.xlu0 %524, %v431
        %v526 = vpop.permute.xlu0 %525
        %529 = vset.pattern.permute.xlu0 0
        %530 = vperm.xlu0 %529, %v432
        %v531 = vpop.permute.xlu0 %530
        %534 = vset.pattern.permute.xlu0 0
        %535 = vperm.xlu0 %534, %v433
        %v536 = vpop.permute.xlu0 %535
        %539 = vset.pattern.permute.xlu0 0
        %540 = vperm.xlu0 %539, %v434
        %v541 = vpop.permute.xlu0 %540
        %544 = vset.pattern.permute.xlu0 0
        %545 = vperm.xlu0 %544, %v435
        %v546 = vpop.permute.xlu0 %545
        %549 = vset.pattern.permute.xlu0 0
        %550 = vperm.xlu0 %549, %v436
        %v551 = vpop.permute.xlu0 %550
        %554 = vset.pattern.permute.xlu0 0
        %555 = vperm.xlu0 %554, %v437
        %v556 = vpop.permute.xlu0 %555
        %559 = vset.pattern.permute.xlu0 0
        %560 = vperm.xlu0 %559, %v438
        %v561 = vpop.permute.xlu0 %560
        %564 = vset.pattern.permute.xlu0 0
        %565 = vperm.xlu0 %564, %v439
        %v566 = vpop.permute.xlu0 %565
        %569 = vset.pattern.permute.xlu0 0
        %570 = vperm.xlu0 %569, %v440
        %v571 = vpop.permute.xlu0 %570
        %574 = vset.pattern.permute.xlu0 0
        %575 = vperm.xlu0 %574, %v441
        %v576 = vpop.permute.xlu0 %575
        %579 = vset.pattern.permute.xlu0 0
        %580 = vperm.xlu0 %579, %v442
        %v581 = vpop.permute.xlu0 %580
        %584 = vset.pattern.permute.xlu0 0
        %585 = vperm.xlu0 %584, %v443
        %v586 = vpop.permute.xlu0 %585
        %589 = vset.pattern.permute.xlu0 0
        %590 = vperm.xlu0 %589, %v444
        %v591 = vpop.permute.xlu0 %590
        %594 = vset.pattern.permute.xlu0 0
        %595 = vperm.xlu0 %594, %v445
        %v596 = vpop.permute.xlu0 %595
        %599 = vset.pattern.permute.xlu0 0
        %600 = vperm.xlu0 %599, %v446
        %v601 = vpop.permute.xlu0 %600
        %604 = vset.pattern.permute.xlu0 0
        %605 = vperm.xlu0 %604, %v447
        %v606 = vpop.permute.xlu0 %605
        %v640 = vunpack.c.l.b16 %v384
        %v641 = vunpack.c.l.b16 %v385
        %v642 = vunpack.c.l.b16 %v386
        %v643 = vunpack.c.l.b16 %v387
        %v644 = vunpack.c.l.b16 %v388
        %v645 = vunpack.c.l.b16 %v389
        %v646 = vunpack.c.l.b16 %v390
        %v647 = vunpack.c.l.b16 %v391
        %v648 = vunpack.c.l.b16 %v392
        %v649 = vunpack.c.l.b16 %v393
        %v650 = vunpack.c.l.b16 %v394
        %v651 = vunpack.c.l.b16 %v395
        %v652 = vunpack.c.l.b16 %v396
        %v653 = vunpack.c.l.b16 %v397
        %v654 = vunpack.c.l.b16 %v398
        %v655 = vunpack.c.l.b16 %v399
        %v656 = vunpack.c.l.b16 %v400
        %v657 = vunpack.c.l.b16 %v401
        %v658 = vunpack.c.l.b16 %v402
        %v659 = vunpack.c.l.b16 %v403
        %v660 = vunpack.c.l.b16 %v404
        %v661 = vunpack.c.l.b16 %v405
        %v662 = vunpack.c.l.b16 %v406
        %v663 = vunpack.c.l.b16 %v407
        %v664 = vunpack.c.l.b16 %v408
        %v665 = vunpack.c.l.b16 %v409
        %v666 = vunpack.c.l.b16 %v410
        %v667 = vunpack.c.l.b16 %v411
        %v668 = vunpack.c.l.b16 %v412
        %v669 = vunpack.c.l.b16 %v413
        %v670 = vunpack.c.l.b16 %v414
        %v671 = vunpack.c.l.b16 %v415
        %v672 = vpack.c.b16 %v641, %v640
        %v673 = vpack.c.b16 %v643, %v642
        %v674 = vpack.c.b16 %v645, %v644
        %v675 = vpack.c.b16 %v647, %v646
        %v676 = vpack.c.b16 %v649, %v648
        %v677 = vpack.c.b16 %v651, %v650
        %v678 = vpack.c.b16 %v653, %v652
        %v679 = vpack.c.b16 %v655, %v654
        %v680 = vpack.c.b16 %v657, %v656
        %v681 = vpack.c.b16 %v659, %v658
        %v682 = vpack.c.b16 %v661, %v660
        %v683 = vpack.c.b16 %v663, %v662
        %v684 = vpack.c.b16 %v665, %v664
        %v685 = vpack.c.b16 %v667, %v666
        %v686 = vpack.c.b16 %v669, %v668
        %v687 = vpack.c.b16 %v671, %v670
        %vm688 = vcmask 293888
        %v690 = vsel %vm688, %v672, 0
        %v693 = vsel %vm688, %v673, 0
        %v696 = vsel %vm688, %v674, 0
        %v699 = vsel %vm688, %v675, 0
        %v702 = vsel %vm688, %v676, 0
        %v705 = vsel %vm688, %v677, 0
        %v708 = vsel %vm688, %v678, 0
        %v711 = vsel %vm688, %v679, 0
        %v714 = vsel %vm688, %v680, 0
        %v717 = vsel %vm688, %v681, 0
        %v720 = vsel %vm688, %v682, 0
        %v723 = vsel %vm688, %v683, 0
        %v726 = vsel %vm688, %v684, 0
        %v729 = vsel %vm688, %v685, 0
        %v732 = vsel %vm688, %v686, 0
        %v735 = vsel %vm688, %v687, 0
        %vm737 = vcmask 1041408
        %v739 = vsel %vm737, %v383, 0
        %741 = vmatprep.subr.bf16.mxu0 0
        %742 = vmatpush1.bf16.msra.mxu0 0
        %743 = vmatprep.subr.bf16.mxu0 0
        %744 = vmatpush1.bf16.msra.mxu0 0
        %745 = vmatprep.subr.bf16.mxu0 0
        %746 = vmatpush1.bf16.msra.mxu0 0
        %747 = vmatprep.subr.bf16.mxu0 0
        %748 = vmatpush1.bf16.msra.mxu0 0
        %749 = vmatprep.subr.bf16.mxu0 0
        %750 = vmatpush1.bf16.msra.mxu0 0
        %751 = vmatprep.subr.bf16.mxu0 0
        %752 = vmatpush1.bf16.msra.mxu0 %v739
        %753 = vmatprep.subr.bf16.mxu0 0
        %754 = vmatpush1.bf16.msra.mxu0 %v382
        %755 = vmatprep.subr.bf16.mxu0 0
        %756 = vmatpush1.bf16.msra.mxu0 %v381
        %757 = vmatprep.subr.bf16.mxu0 0
        %758 = vmatpush2.bf16.msra.mxu0 0
        %759 = vmatprep.subr.bf16.mxu0 0
        %760 = vmatpush2.bf16.msra.mxu0 0
        %761 = vmatprep.subr.bf16.mxu0 0
        %762 = vmatpush2.bf16.msra.mxu0 0
        %763 = vmatprep.subr.bf16.mxu0 0
        %764 = vmatpush2.bf16.msra.mxu0 0
        %765 = vmatprep.subr.bf16.mxu0 0
        %766 = vmatpush2.bf16.msra.mxu0 0
        %767 = vmatprep.subr.bf16.mxu0 0
        %768 = vmatpush2.bf16.msra.mxu0 0
        %769 = vmatprep.subr.bf16.mxu0 0
        %770 = vmatpush2.bf16.msra.mxu0 0
        %771 = vmatprep.subr.bf16.mxu0 0
        %772 = vmatpush2.bf16.msra.mxu0 0
        %773 = vmatprep.mubr.bf16.mxu0 0
        %774 = vmatmul.mubr.bf16.gmra.mxu0 %v690
        %v775 = vpop.f32.mrf.mxu0
        %v776 = vadd.f32 %v451, %v775
        %v777 = vpop.f32.mrf.mxu0
        %v778 = vpop.f32.mrf.mxu0
        %v779 = vadd.f32 %v456, %v778
        %v780 = vpop.f32.mrf.mxu0
        %781 = vmatprep.mubr.bf16.mxu0 0
        %782 = vmatmul.mubr.bf16.gmra.mxu0 %v693
        %v783 = vpop.f32.mrf.mxu0
        %v784 = vadd.f32 %v461, %v783
        %v785 = vpop.f32.mrf.mxu0
        %v786 = vpop.f32.mrf.mxu0
        %v787 = vadd.f32 %v466, %v786
        %v788 = vpop.f32.mrf.mxu0
        %789 = vmatprep.mubr.bf16.mxu0 0
        %790 = vmatmul.mubr.bf16.gmra.mxu0 %v696
        %v791 = vpop.f32.mrf.mxu0
        %v792 = vadd.f32 %v471, %v791
        %v793 = vpop.f32.mrf.mxu0
        %v794 = vpop.f32.mrf.mxu0
        %v795 = vadd.f32 %v476, %v794
        %v796 = vpop.f32.mrf.mxu0
        %797 = vmatprep.mubr.bf16.mxu0 0
        %798 = vmatmul.mubr.bf16.gmra.mxu0 %v699
        %v799 = vpop.f32.mrf.mxu0
        %v800 = vadd.f32 %v481, %v799
        %v801 = vpop.f32.mrf.mxu0
        %v802 = vpop.f32.mrf.mxu0
        %v803 = vadd.f32 %v486, %v802
        %v804 = vpop.f32.mrf.mxu0
        %805 = vmatprep.mubr.bf16.mxu0 0
        %806 = vmatmul.mubr.bf16.gmra.mxu0 %v702
        %v807 = vpop.f32.mrf.mxu0
        %v808 = vadd.f32 %v491, %v807
        %v809 = vpop.f32.mrf.mxu0
        %v810 = vpop.f32.mrf.mxu0
        %v811 = vadd.f32 %v496, %v810
        %v812 = vpop.f32.mrf.mxu0
        %813 = vmatprep.mubr.bf16.mxu0 0
        %814 = vmatmul.mubr.bf16.gmra.mxu0 %v705
        %v815 = vpop.f32.mrf.mxu0
        %v816 = vadd.f32 %v501, %v815
        %v817 = vpop.f32.mrf.mxu0
        %v818 = vpop.f32.mrf.mxu0
        %v819 = vadd.f32 %v506, %v818
        %v820 = vpop.f32.mrf.mxu0
        %821 = vmatprep.mubr.bf16.mxu0 0
        %822 = vmatmul.mubr.bf16.gmra.mxu0 %v708
        %v823 = vpop.f32.mrf.mxu0
        %v824 = vadd.f32 %v511, %v823
        %v825 = vpop.f32.mrf.mxu0
        %v826 = vpop.f32.mrf.mxu0
        %v827 = vadd.f32 %v516, %v826
        %v828 = vpop.f32.mrf.mxu0
        %829 = vmatprep.mubr.bf16.mxu0 0
        %830 = vmatmul.mubr.bf16.gmra.mxu0 %v711
        %v831 = vpop.f32.mrf.mxu0
        %v832 = vadd.f32 %v521, %v831
        %v833 = vpop.f32.mrf.mxu0
        %v834 = vpop.f32.mrf.mxu0
        %v835 = vadd.f32 %v526, %v834
        %v836 = vpop.f32.mrf.mxu0
        %837 = vmatprep.mubr.bf16.mxu0 0
        %838 = vmatmul.mubr.bf16.gmra.mxu0 %v714
        %v839 = vpop.f32.mrf.mxu0
        %v840 = vadd.f32 %v531, %v839
        %v841 = vpop.f32.mrf.mxu0
        %v842 = vpop.f32.mrf.mxu0
        %v843 = vadd.f32 %v536, %v842
        %v844 = vpop.f32.mrf.mxu0
        %845 = vmatprep.mubr.bf16.mxu0 0
        %846 = vmatmul.mubr.bf16.gmra.mxu0 %v717
        %v847 = vpop.f32.mrf.mxu0
        %v848 = vadd.f32 %v541, %v847
        %v849 = vpop.f32.mrf.mxu0
        %v850 = vpop.f32.mrf.mxu0
        %v851 = vadd.f32 %v546, %v850
        %v852 = vpop.f32.mrf.mxu0
        %853 = vmatprep.mubr.bf16.mxu0 0
        %854 = vmatmul.mubr.bf16.gmra.mxu0 %v720
        %v855 = vpop.f32.mrf.mxu0
        %v856 = vadd.f32 %v551, %v855
        %v857 = vpop.f32.mrf.mxu0
        %v858 = vpop.f32.mrf.mxu0
        %v859 = vadd.f32 %v556, %v858
        %v860 = vpop.f32.mrf.mxu0
        %861 = vmatprep.mubr.bf16.mxu0 0
        %862 = vmatmul.mubr.bf16.gmra.mxu0 %v723
        %v863 = vpop.f32.mrf.mxu0
        %v864 = vadd.f32 %v561, %v863
        %v865 = vpop.f32.mrf.mxu0
        %v866 = vpop.f32.mrf.mxu0
        %v867 = vadd.f32 %v566, %v866
        %v868 = vpop.f32.mrf.mxu0
        %869 = vmatprep.mubr.bf16.mxu0 0
        %870 = vmatmul.mubr.bf16.gmra.mxu0 %v726
        %v871 = vpop.f32.mrf.mxu0
        %v872 = vadd.f32 %v571, %v871
        %v873 = vpop.f32.mrf.mxu0
        %v874 = vpop.f32.mrf.mxu0
        %v875 = vadd.f32 %v576, %v874
        %v876 = vpop.f32.mrf.mxu0
        %877 = vmatprep.mubr.bf16.mxu0 0
        %878 = vmatmul.mubr.bf16.gmra.mxu0 %v729
        %v879 = vpop.f32.mrf.mxu0
        %v880 = vadd.f32 %v581, %v879
        %v881 = vpop.f32.mrf.mxu0
        %v882 = vpop.f32.mrf.mxu0
        %v883 = vadd.f32 %v586, %v882
        %v884 = vpop.f32.mrf.mxu0
        %885 = vmatprep.mubr.bf16.mxu0 0
        %886 = vmatmul.mubr.bf16.gmra.mxu0 %v732
        %v887 = vpop.f32.mrf.mxu0
        %v888 = vadd.f32 %v591, %v887
        %v889 = vpop.f32.mrf.mxu0
        %v890 = vpop.f32.mrf.mxu0
        %v891 = vadd.f32 %v596, %v890
        %v892 = vpop.f32.mrf.mxu0
        %893 = vmatprep.mubr.bf16.mxu0 0
        %894 = vmatmul.mubr.bf16.gmra.mxu0 %v735
        %v895 = vpop.f32.mrf.mxu0
        %v896 = vadd.f32 %v601, %v895
        %v897 = vpop.f32.mrf.mxu0
        %v898 = vpop.f32.mrf.mxu0
        %v899 = vadd.f32 %v606, %v898
        %v900 = vpop.f32.mrf.mxu0
        %901 = vdwg.mxu0
        %v902 = vmax.f32 %v776, 0.0
        %v903 = vmax.f32 %v779, 0.0
        %v904 = vmax.f32 %v784, 0.0
        %v905 = vmax.f32 %v787, 0.0
        %v906 = vmax.f32 %v792, 0.0
        %v907 = vmax.f32 %v795, 0.0
        %v908 = vmax.f32 %v800, 0.0
        %v909 = vmax.f32 %v803, 0.0
        %v910 = vmax.f32 %v808, 0.0
        %v911 = vmax.f32 %v811, 0.0
        %v912 = vmax.f32 %v816, 0.0
        %v913 = vmax.f32 %v819, 0.0
        %v914 = vmax.f32 %v824, 0.0
        %v915 = vmax.f32 %v827, 0.0
        %v916 = vmax.f32 %v832, 0.0
        %v917 = vmax.f32 %v835, 0.0
        %v918 = vmax.f32 %v840, 0.0
        %v919 = vmax.f32 %v843, 0.0
        %v920 = vmax.f32 %v848, 0.0
        %v921 = vmax.f32 %v851, 0.0
        %v922 = vmax.f32 %v856, 0.0
        %v923 = vmax.f32 %v859, 0.0
        %v924 = vmax.f32 %v864, 0.0
        %v925 = vmax.f32 %v867, 0.0
        %v926 = vmax.f32 %v872, 0.0
        %v927 = vmax.f32 %v875, 0.0
        %v928 = vmax.f32 %v880, 0.0
        %v929 = vmax.f32 %v883, 0.0
        %v930 = vmax.f32 %v888, 0.0
        %v931 = vmax.f32 %v891, 0.0
        %v932 = vmax.f32 %v896, 0.0
        %v933 = vmax.f32 %v899, 0.0
        %v934 = vpack.c.bf16 %v903, %v902
        %v935 = vpack.c.bf16 %v905, %v904
        %v936 = vpack.c.bf16 %v907, %v906
        %v937 = vpack.c.bf16 %v909, %v908
        %v938 = vpack.c.bf16 %v911, %v910
        %v939 = vpack.c.bf16 %v913, %v912
        %v940 = vpack.c.bf16 %v915, %v914
        %v941 = vpack.c.bf16 %v917, %v916
        %v942 = vpack.c.bf16 %v919, %v918
        %v943 = vpack.c.bf16 %v921, %v920
        %v944 = vpack.c.bf16 %v923, %v922
        %v945 = vpack.c.bf16 %v925, %v924
        %v946 = vpack.c.bf16 %v927, %v926
        %v947 = vpack.c.bf16 %v929, %v928
        %v948 = vpack.c.bf16 %v931, %v930
        %v949 = vpack.c.bf16 %v933, %v932
        %v950 = vld [vmem:[%s4] sm:$0x3]
        %v951 = vld [vmem:[%s5] sm:$0x3]
        %953 = vset.pattern.permute.xlu0 0
        %954 = vperm.xlu0 %953, %v951
        %v955 = vpop.permute.xlu0 %954
        %v959 = vunpack.c.l.s4 1966171168
        %v960 = vunpack.c.0.s8 %v959
        %v961 = vlaneseq
        %v962 = vshrl.u32 %v961, 7
        %v963 = vsub.s32 %v960, %v962
        %v964 = vrot.slane %v950, %v963
        %v965 = vcombine.high %v964, %v964
        %v967 = vunpack.c.l.s4 1966171168
        %v968 = vunpack.c.0.s8 %v967
        %v969 = vlaneseq
        %v970 = vshrl.u32 %v969, 7
        %v971 = vsub.s32 %v968, %v970
        %v972 = vrot.slane %v964, %v971
        %v974 = vunpack.c.l.s4 1966171168
        %v975 = vunpack.c.0.s8 %v974
        %v976 = vlaneseq
        %v977 = vshrl.u32 %v976, 7
        %v978 = vsub.s32 %v975, %v977
        %v979 = vrot.slane %v965, %v978
        %982 = vmatprep.subr.bf16.mxu0 0
        %983 = vmatpush1.bf16.msra.mxu0 %v941
        %984 = vmatprep.subr.bf16.mxu0 0
        %985 = vmatpush1.bf16.msra.mxu0 %v940
        %986 = vmatprep.subr.bf16.mxu0 0
        %987 = vmatpush1.bf16.msra.mxu0 %v939
        %988 = vmatprep.subr.bf16.mxu0 0
        %989 = vmatpush1.bf16.msra.mxu0 %v938
        %990 = vmatprep.subr.bf16.mxu0 0
        %991 = vmatpush1.bf16.msra.mxu0 %v937
        %992 = vmatprep.subr.bf16.mxu0 0
        %993 = vmatpush1.bf16.msra.mxu0 %v936
        %994 = vmatprep.subr.bf16.mxu0 0
        %995 = vmatpush1.bf16.msra.mxu0 %v935
        %996 = vmatprep.subr.bf16.mxu0 0
        %997 = vmatpush1.bf16.msra.mxu0 %v934
        %998 = vmatprep.subr.bf16.mxu0 0
        %999 = vmatpush2.bf16.msra.mxu0 %v949
        %1000 = vmatprep.subr.bf16.mxu0 0
        %1001 = vmatpush2.bf16.msra.mxu0 %v948
        %1002 = vmatprep.subr.bf16.mxu0 0
        %1003 = vmatpush2.bf16.msra.mxu0 %v947
        %1004 = vmatprep.subr.bf16.mxu0 0
        %1005 = vmatpush2.bf16.msra.mxu0 %v946
        %1006 = vmatprep.subr.bf16.mxu0 0
        %1007 = vmatpush2.bf16.msra.mxu0 %v945
        %1008 = vmatprep.subr.bf16.mxu0 0
        %1009 = vmatpush2.bf16.msra.mxu0 %v944
        %1010 = vmatprep.subr.bf16.mxu0 0
        %1011 = vmatpush2.bf16.msra.mxu0 %v943
        %1012 = vmatprep.subr.bf16.mxu0 0
        %1013 = vmatpush2.bf16.msra.mxu0 %v942
        %1014 = vmatprep.mubr.bf16.mxu0 %v979
        %1015 = vmatmul.mubr.bf16.gmra.mxu0 %v972
        %v1016 = vpop.f32.mrf.mxu0
        %v1017 = vadd.f32 %v955, %v1016
        %v1018 = vpop.f32.mrf.mxu0
        %v1019 = vpop.f32.mrf.mxu0
        %v1020 = vpop.f32.mrf.mxu0
        %1021 = vdwg.mxu0
        %1022 = vst [vmem:[%s269] sm:$0x3] %v1017
        %s1023 = sand.u32 %s178, 1
        %s1024 = scalar_lea.sflag [#allocation4], %s1023
        %s1025 = sand.u32 %s178, 1
        %s1026 = smul.addr %s1025, 2
        %s1027 = scalar_lea.vmem [#allocation3], %s1026
        // Predicated region
        $region45: #{tpu_custom_call.1} parent=43 // pred_check
          %p1028 = pneg %p188
        $region46: #{tpu_custom_call.1} parent=43 // pred_check_branch
          %1030 = sbr.rel (%p1028) target = $region48
        $region47: #{tpu_custom_call.1} parent=43 // pred_region
          %s1032 = ssub.s32 32, 32
          %1033 = vsyncadd %s1024, %s1032
          %s1034 = smul.addr %s24, 2
          %s1035 = sadd.s32 %s25, %s1034
          %s1036 = smul.addr %s1035, 32
          %s1037 = scalar_lea.hbm %s6, %s1036
          %s1039 = sshll.u32 %s1027, 4
          %s1040 = int_to_ptr.vmem [resolvable:$true] %s1039
          %1042 = dma.vmem_to_hbm [thread:$0]  %s1040, 32, %s1037, %s1024
        $region48: #{tpu_custom_call.1} parent=43 // pred_fallthru
          _
      $region44: #{tpu_custom_call.1} parent=5 // pred_fallthru
        _
      %p1043 = scmp.le.s32.totalorder 2, %s15
      // Predicated region
      $region49: #{tpu_custom_call.1} parent=5 // pred_check
        %p1044 = pneg %p1043
      $region50: #{tpu_custom_call.1} parent=5 // pred_check_branch
        %1046 = sbr.rel (%p1044) target = $region52
      $region51: #{tpu_custom_call.1} parent=5 // pred_region
        %s1047 = ssub.s32 %s15, 2
        // Predicated region
        $region53: #{tpu_custom_call.1} parent=51 // pred_check
          %p1048 = pneg %p194
        $region54: #{tpu_custom_call.1} parent=51 // pred_check_branch
          %1050 = sbr.rel (%p1048) target = $region56
        $region55: #{tpu_custom_call.1} parent=51 // pred_region
          %s1051 = sand.u32 %s179, 1
          %s1052 = scalar_lea.sflag [#allocation4], %s1051
          %s1053 = sand.u32 %s179, 1
          %s1054 = smul.addr %s1053, 2
          %s1055 = scalar_lea.vmem [#allocation3], %s1054
          %1056 = dma.done %s1052, 32
        $region56: #{tpu_custom_call.1} parent=51 // pred_fallthru
          _
      $region52: #{tpu_custom_call.1} parent=5 // pred_fallthru
        _
    $region6: #{tpu_custom_call.1} parent=1 // loop_footer
      %s19 = sadd.s32 1, %s15
    $region7: #{tpu_custom_call.1} parent=1 // loop_footer_branch
      %14 = sbr.rel target = $region3
    $region8: #{tpu_custom_call.1} parent=1 // loop_exit
      _
    %1057 = vsyncpa [#allocation4], 1
    %s1058 = scalar_lea.sflag [#allocation4], 1
    %1059 = vsyncpa %s1058, 1

</llo_original>
